<compile_context>
chip_gen: v5e
topology: v5e:2x2
jax: 0.10.0
libtpu: 0.0.40
codegen_flags: <defaults>
</compile_context>

<pallas_src>
import jax
import jax.numpy as jnp
from jax.experimental import pallas as pl
from jax.experimental.pallas import tpu as pltpu


def _cdiv(a, b):
    return (a + b - 1) // b


def _round_up(x, m):
    return ((x + m - 1) // m) * m


def fuse_rnd_params(target_params, source_params, compute_dtype=jnp.float32):
    """Fuse target & source MLPs into ONE lane-concatenated MLP whose final
    linear layer directly produces (source - target).

    target_params / source_params: list of (W, b) with W [in, out], b [1, out].
    Returns list of (W_fused, b_fused); weights cast to compute_dtype, biases f32.
    """
    n_layers = len(target_params)
    assert n_layers >= 2, "expected at least one hidden layer"
    fused = []
    for li in range(n_layers):
        t_w, t_b = target_params[li]
        s_w, s_b = source_params[li]
        if li == 0:
            w = jnp.concatenate([t_w, s_w], axis=1)                # [in, 2*out]
            b = jnp.concatenate([t_b, s_b], axis=1)                # [1, 2*out]
        elif li < n_layers - 1:
            zero_ts = jnp.zeros((t_w.shape[0], s_w.shape[1]), t_w.dtype)
            zero_st = jnp.zeros((s_w.shape[0], t_w.shape[1]), s_w.dtype)
            w = jnp.concatenate(
                [jnp.concatenate([t_w, zero_ts], axis=1),
                 jnp.concatenate([zero_st, s_w], axis=1)], axis=0)  # [2in, 2out]
            b = jnp.concatenate([t_b, s_b], axis=1)                 # [1, 2*out]
        else:
            # diff = [h_t | h_s] @ [[-tW], [sW]] + (sb - tb)
            w = jnp.concatenate([-t_w, s_w], axis=0)                # [2*in, out]
            b = s_b - t_b                                           # [1, out]
        fused.append((w.astype(compute_dtype), b.astype(jnp.float32)))
    return fused


def _make_rnd_kernel(n_layers, batch, block_rows, tiles_per_core, compute_dtype):
    def kernel(*refs):
        obs_ref = refs[0]
        param_refs = refs[1:1 + 2 * n_layers]
        out_ref = refs[1 + 2 * n_layers]
        acc_ref = refs[2 + 2 * n_layers]          # (1, 1) f32 VMEM accumulator

        c = pl.program_id(0)                      # "parallel" slice (TC on v7x)
        i = pl.program_id(1)                      # "arbitrary" batch-tile axis

        @pl.when(i == 0)
        def _init():
            acc_ref[...] = jnp.zeros_like(acc_ref)

        # Fused MLP chain; f32 MXU accumulation, f32 bias add, f32 tanh.
        h = obs_ref[...]
        for li in range(n_layers):
            w = param_refs[2 * li][...]
            b = param_refs[2 * li + 1][...]
            z = jnp.dot(h.astype(compute_dtype), w,
                        preferred_element_type=jnp.float32) + b
            h = jnp.tanh(z) if li < n_layers - 1 else z
        # h is already (source - target), f32, shape [block_rows, n_out].

        sq = h * h

        # Mask padded rows (rows >= true batch size) before accumulating.
        row = jax.lax.broadcasted_iota(jnp.int32, (block_rows, 1), 0)
        row = row + (c * tiles_per_core + i) * block_rows
        sq = jnp.where(row < batch, sq, 0.0)

        partial = jnp.sum(sq, axis=1, keepdims=True)        # [block_rows, 1]
        partial = jnp.sum(partial, axis=0, keepdims=True)   # [1, 1]
        acc_ref[...] += partial

        # Write the per-slice partial sum once, at the last batch tile.
        @pl.when(i == pl.num_programs(1) - 1)
        def _finalize():
            out_ref[...] = acc_ref[...] + jnp.zeros(out_ref.shape, jnp.float32)

    return kernel


def mlp_rnd_forward(obs, target_params, source_params, *,
                    block_rows=1024, compute_dtype=jnp.float32,
                    num_parallel=2):
    """obs: [B, obs_dim] f32. *_params: list of (W, b), W [in, out], b [1, out].
    Returns scalar MSE(source_net(obs), target_net(obs))."""
    batch, obs_dim = obs.shape
    n_layers = len(target_params)
    n_out = target_params[-1][0].shape[1]

    fused = fuse_rnd_params(target_params, source_params, compute_dtype)

    # Batch tiling: (num_parallel, tiles_per_core) grid over row blocks.
    bm = min(_round_up(block_rows, 8), _round_up(batch, 8))
    tiles_total = _cdiv(batch, bm)
    tiles_per_core = _cdiv(tiles_total, num_parallel)
    batch_pad = num_parallel * tiles_per_core * bm

    x = obs.astype(compute_dtype)
    if batch_pad != batch:
        x = jnp.pad(x, ((0, batch_pad - batch), (0, 0)))

    flat_params = []
    param_specs = []
    for (w, b) in fused:
        flat_params += [w, b]
        # Constant block index across the grid -> weights stay resident in VMEM.
        param_specs += [pl.BlockSpec(w.shape, lambda c, i: (0, 0)),
                        pl.BlockSpec(b.shape, lambda c, i: (0, 0))]

    obs_spec = pl.BlockSpec((bm, obs_dim),
                            lambda c, i: (c * tiles_per_core + i, 0))
    # One (8, 128) output tile per parallel slice; only [0, 0] of each is used.
    out_spec = pl.BlockSpec((8, 128), lambda c, i: (c, 0))

    kernel = _make_rnd_kernel(n_layers, batch, bm, tiles_per_core, compute_dtype)

    out = pl.pallas_call(
        kernel,
        out_shape=jax.ShapeDtypeStruct((num_parallel * 8, 128), jnp.float32),
        grid_spec=pltpu.PrefetchScalarGridSpec(
            num_scalar_prefetch=0,
            grid=(num_parallel, tiles_per_core),
            in_specs=[obs_spec] + param_specs,
            out_specs=out_spec,
            scratch_shapes=[pltpu.VMEM((1, 1), jnp.float32)],
        ),
        compiler_params=pltpu.CompilerParams(
            dimension_semantics=("parallel", "arbitrary"),
            vmem_limit_bytes=32 * 1024 * 1024,
        ),
    )(x, *flat_params)

    partial_sums = out[0::8, 0]                  # one partial sum per slice
    return jnp.sum(partial_sums) / float(batch * n_out)


def init_mlp_params(key, sizes):
    """PyTorch-Linear-style uniform init, deterministic. W returned as [in, out]."""
    params = []
    for j in range(len(sizes) - 1):
        fan_in, fan_out = sizes[j], sizes[j + 1]
        key, kw, kb = jax.random.split(key, 3)
        bound = 1.0 / (fan_in ** 0.5)
        w = jax.random.uniform(kw, (fan_in, fan_out), jnp.float32, -bound, bound)
        b = jax.random.uniform(kb, (1, fan_out), jnp.float32, -bound, bound)
        params.append((w, b))
    return params, key


def reference_forward(obs, target_params, source_params):
    """Plain-JAX reference for sanity checking."""
    def run(x, params):
        h = x
        for i, (w, b) in enumerate(params):
            h = h @ w + b
            if i < len(params) - 1:
                h = jnp.tanh(h)
        return h
    t = run(obs, target_params)
    s = run(obs, source_params)
    return jnp.mean((s - t) ** 2)


if __name__ == "__main__":
    # Small shapes consistent with the module: obs_dim=16, hid_sizes=(32, 32), out=5.
    B, obs_dim = 8, 16
    hid_sizes = (32, 32)
    n_out = 5
    sizes = [obs_dim] + list(hid_sizes) + [n_out]

    key = jax.random.PRNGKey(0)
    key, k_obs = jax.random.split(key)
    obs = jax.random.normal(k_obs, (B, obs_dim), jnp.float32)

    target_params, key = init_mlp_params(key, sizes)
    source_params, key = init_mlp_params(key, sizes)

    # --- f32 path, single tile per slice ---
    loss = mlp_rnd_forward(obs, target_params, source_params, block_rows=8)
    loss = jax.block_until_ready(loss)
    ref = reference_forward(obs, target_params, source_params)
    assert jnp.allclose(loss, ref, rtol=1e-3, atol=1e-6), (loss, ref)

    # --- f32 path, multi-tile + ragged batch (exercises accumulation & masking) ---
    B2 = 50
    key, k_obs2 = jax.random.split(key)
    obs2 = jax.random.normal(k_obs2, (B2, obs_dim), jnp.float32)
    loss2 = mlp_rnd_forward(obs2, target_params, source_params, block_rows=16)
    loss2 = jax.block_until_ready(loss2)
    ref2 = reference_forward(obs2, target_params, source_params)
    assert jnp.allclose(loss2, ref2, rtol=1e-3, atol=1e-6), (loss2, ref2)

    # --- bf16 MXU inputs (v6e/v7x feed), f32 accumulation & reduction ---
    loss_bf16 = mlp_rnd_forward(obs2, target_params, source_params,
                                block_rows=16, compute_dtype=jnp.bfloat16)
    loss_bf16 = jax.block_until_ready(loss_bf16)
    assert jnp.allclose(loss_bf16, ref2, rtol=1e-1, atol=1e-3), (loss_bf16, ref2)

    # TODO(synk): MlpActorCritic's actor sampling (Normal/Independent) and
    # RunningStats normalization are host/XLA-side and not part of this kernel.
    print("KERNEL_OK")
</pallas_src>

<mosaic_0001>
module attributes {stable_mosaic.version = 11 : i64} {
  func.func @kernel(%arg0: i32, %arg1: i32, %arg2: memref<8x16xf32, #tpu.memory_space<vmem>>, %arg3: memref<16x64xf32, #tpu.memory_space<vmem>>, %arg4: memref<1x64xf32, #tpu.memory_space<vmem>>, %arg5: memref<64x64xf32, #tpu.memory_space<vmem>>, %arg6: memref<1x64xf32, #tpu.memory_space<vmem>>, %arg7: memref<64x5xf32, #tpu.memory_space<vmem>>, %arg8: memref<1x5xf32, #tpu.memory_space<vmem>>, %arg9: memref<8x128xf32, #tpu.memory_space<vmem>>, %arg10: memref<1x1xf32, #tpu.memory_space<vmem>>) attributes {dimension_semantics = [#tpu.dimension_semantics<parallel>, #tpu.dimension_semantics<arbitrary>], iteration_bounds = array<i64: 2, 1>, scalar_prefetch = 0 : i64, scratch_operands = 1 : i64, tpu.core_type = #tpu.core_type<tc>, window_params = [{transform_indices = @transform_0, window_bounds = array<i64: 8, 16>}, {pipeline_mode = #tpu.pipeline_mode<synchronous>, transform_indices = @transform_1, window_bounds = array<i64: 16, 64>}, {pipeline_mode = #tpu.pipeline_mode<synchronous>, transform_indices = @transform_2, window_bounds = array<i64: 1, 64>}, {pipeline_mode = #tpu.pipeline_mode<synchronous>, transform_indices = @transform_3, window_bounds = array<i64: 64, 64>}, {pipeline_mode = #tpu.pipeline_mode<synchronous>, transform_indices = @transform_4, window_bounds = array<i64: 1, 64>}, {pipeline_mode = #tpu.pipeline_mode<synchronous>, transform_indices = @transform_5, window_bounds = array<i64: 64, 5>}, {pipeline_mode = #tpu.pipeline_mode<synchronous>, transform_indices = @transform_6, window_bounds = array<i64: 1, 5>}, {transform_indices = @transform_7, window_bounds = array<i64: 8, 128>}]} {
    %c0_i32 = arith.constant 0 : i32
    %0 = arith.cmpi eq, %arg1, %c0_i32 : i32
    %1 = arith.extui %0 : i1 to i32
    %c0_i32_0 = arith.constant 0 : i32
    %2 = arith.cmpi ne, %1, %c0_i32_0 : i32
    scf.if %2 {
      %cst_26 = arith.constant 0.000000e+00 : f32
      %44 = vector.broadcast %cst_26 : f32 to vector<1x1xf32>
      %c0_27 = arith.constant 0 : index
      %c0_28 = arith.constant 0 : index
      %45 = vector.load %arg10[%c0_27, %c0_28] : memref<1x1xf32, #tpu.memory_space<vmem>>, vector<1x1xf32>
      tpu.vector_store %arg10[%c0_27, %c0_28], %44 {strides = array<i32>} : memref<1x1xf32, #tpu.memory_space<vmem>>, vector<1x1xf32>,
    } else {
    }
    %c0 = arith.constant 0 : index
    %c0_1 = arith.constant 0 : index
    %3 = vector.load %arg2[%c0, %c0_1] : memref<8x16xf32, #tpu.memory_space<vmem>>, vector<8x16xf32>
    %c0_2 = arith.constant 0 : index
    %c0_3 = arith.constant 0 : index
    %4 = vector.load %arg3[%c0_2, %c0_3] : memref<16x64xf32, #tpu.memory_space<vmem>>, vector<16x64xf32>
    %c0_4 = arith.constant 0 : index
    %c0_5 = arith.constant 0 : index
    %5 = vector.load %arg4[%c0_4, %c0_5] : memref<1x64xf32, #tpu.memory_space<vmem>>, vector<1x64xf32>
    %cst = arith.constant dense<0.000000e+00> : vector<8x64xf32>
    %6 = tpu.matmul %3, %4, %cst {dimension_numbers = #tpu.dot_dimension_numbers<[1], [0], [0], [1], [0, 0, 1, 1], [], []>} : vector<8x16xf32>, vector<16x64xf32>, vector<8x64xf32> -> vector<8x64xf32>
    %7 = vector.broadcast %5 : vector<1x64xf32> to vector<8x64xf32>
    %8 = arith.addf %6, %7 : vector<8x64xf32>
    %9 = math.tanh %8 : vector<8x64xf32>
    %c0_6 = arith.constant 0 : index
    %c0_7 = arith.constant 0 : index
    %10 = vector.load %arg5[%c0_6, %c0_7] : memref<64x64xf32, #tpu.memory_space<vmem>>, vector<64x64xf32>
    %c0_8 = arith.constant 0 : index
    %c0_9 = arith.constant 0 : index
    %11 = vector.load %arg6[%c0_8, %c0_9] : memref<1x64xf32, #tpu.memory_space<vmem>>, vector<1x64xf32>
    %cst_10 = arith.constant dense<0.000000e+00> : vector<8x64xf32>
    %12 = tpu.matmul %9, %10, %cst_10 {dimension_numbers = #tpu.dot_dimension_numbers<[1], [0], [0], [1], [0, 0, 1, 1], [], []>} : vector<8x64xf32>, vector<64x64xf32>, vector<8x64xf32> -> vector<8x64xf32>
    %13 = vector.broadcast %11 : vector<1x64xf32> to vector<8x64xf32>
    %14 = arith.addf %12, %13 : vector<8x64xf32>
    %15 = math.tanh %14 : vector<8x64xf32>
    %c0_11 = arith.constant 0 : index
    %c0_12 = arith.constant 0 : index
    %16 = vector.load %arg7[%c0_11, %c0_12] : memref<64x5xf32, #tpu.memory_space<vmem>>, vector<64x5xf32>
    %c0_13 = arith.constant 0 : index
    %c0_14 = arith.constant 0 : index
    %17 = vector.load %arg8[%c0_13, %c0_14] : memref<1x5xf32, #tpu.memory_space<vmem>>, vector<1x5xf32>
    %cst_15 = arith.constant dense<0.000000e+00> : vector<8x5xf32>
    %18 = tpu.matmul %15, %16, %cst_15 {dimension_numbers = #tpu.dot_dimension_numbers<[1], [0], [0], [1], [0, 0, 1, 1], [], []>} : vector<8x64xf32>, vector<64x5xf32>, vector<8x5xf32> -> vector<8x5xf32>
    %19 = vector.broadcast %17 : vector<1x5xf32> to vector<8x5xf32>
    %20 = arith.addf %18, %19 : vector<8x5xf32>
    %21 = arith.mulf %20, %20 : vector<8x5xf32>
    %22 = tpu.iota {dimensions = array<i32: 0>} : vector<8x1xi32>
    %c1_i32 = arith.constant 1 : i32
    %23 = arith.muli %arg0, %c1_i32 : i32
    %24 = arith.addi %23, %arg1 : i32
    %c8_i32 = arith.constant 8 : i32
    %25 = arith.muli %24, %c8_i32 : i32
    %26 = vector.broadcast %25 : i32 to vector<8x1xi32>
    %27 = arith.addi %22, %26 : vector<8x1xi32>
    %c8_i32_16 = arith.constant 8 : i32
    %28 = vector.broadcast %c8_i32_16 : i32 to vector<8x1xi32>
    %29 = arith.cmpi slt, %27, %28 : vector<8x1xi32>
    %cst_17 = arith.constant 0.000000e+00 : f32
    %30 = vector.shape_cast %29 : vector<8x1xi1> to vector<8x1xi1>
    %31 = vector.broadcast %30 : vector<8x1xi1> to vector<8x5xi1>
    %32 = vector.broadcast %cst_17 : f32 to vector<8x5xf32>
    %33 = arith.select %31, %21, %32 : vector<8x5xi1>, vector<8x5xf32>
    %cst_18 = arith.constant dense<0.000000e+00> : vector<8xf32>
    %34 = vector.multi_reduction <add>, %33, %cst_18 [1] : vector<8x5xf32> to vector<8xf32>
    %35 = vector.shape_cast %34 : vector<8xf32> to vector<8x1xf32>
    %cst_19 = arith.constant dense<0.000000e+00> : vector<1xf32>
    %36 = vector.multi_reduction <add>, %35, %cst_19 [0] : vector<8x1xf32> to vector<1xf32>
    %37 = vector.shape_cast %36 : vector<1xf32> to vector<1x1xf32>
    %c0_20 = arith.constant 0 : index
    %c0_21 = arith.constant 0 : index
    %38 = vector.load %arg10[%c0_20, %c0_21] : memref<1x1xf32, #tpu.memory_space<vmem>>, vector<1x1xf32>
    %39 = arith.addf %38, %37 : vector<1x1xf32>
    %c0_22 = arith.constant 0 : index
    %c0_23 = arith.constant 0 : index
    %40 = vector.load %arg10[%c0_22, %c0_23] : memref<1x1xf32, #tpu.memory_space<vmem>>, vector<1x1xf32>
    tpu.vector_store %arg10[%c0_22, %c0_23], %39 {strides = array<i32>} : memref<1x1xf32, #tpu.memory_space<vmem>>, vector<1x1xf32>,
    %c0_i32_24 = arith.constant 0 : i32
    %41 = arith.cmpi eq, %arg1, %c0_i32_24 : i32
    %42 = arith.extui %41 : i1 to i32
    %c0_i32_25 = arith.constant 0 : i32
    %43 = arith.cmpi ne, %42, %c0_i32_25 : i32
    scf.if %43 {
      %c0_26 = arith.constant 0 : index
      %c0_27 = arith.constant 0 : index
      %44 = vector.load %arg10[%c0_26, %c0_27] : memref<1x1xf32, #tpu.memory_space<vmem>>, vector<1x1xf32>
      %cst_28 = arith.constant 0.000000e+00 : f32
      %45 = vector.broadcast %cst_28 : f32 to vector<8x128xf32>
      %46 = vector.broadcast %44 : vector<1x1xf32> to vector<8x128xf32>
      %47 = arith.addf %46, %45 : vector<8x128xf32>
      %c0_29 = arith.constant 0 : index
      %c0_30 = arith.constant 0 : index
      %48 = vector.load %arg9[%c0_29, %c0_30] : memref<8x128xf32, #tpu.memory_space<vmem>>, vector<8x128xf32>
      tpu.vector_store %arg9[%c0_29, %c0_30], %47 {strides = array<i32>} : memref<8x128xf32, #tpu.memory_space<vmem>>, vector<8x128xf32>,
    } else {
    }
    return
  }
  func.func @transform_0(%arg0: i32, %arg1: i32) -> (i32, i32) {
    %c1_i32 = arith.constant 1 : i32
    %0 = arith.muli %arg0, %c1_i32 : i32
    %1 = arith.addi %0, %arg1 : i32
    %c0_i32 = arith.constant 0 : i32
    %c0_i32_0 = arith.constant 0 : i32
    return %1, %c0_i32 : i32, i32
  }
  func.func @transform_1(%arg0: i32, %arg1: i32) -> (i32, i32) {
    %c0_i32 = arith.constant 0 : i32
    %c0_i32_0 = arith.constant 0 : i32
    %c0_i32_1 = arith.constant 0 : i32
    return %c0_i32, %c0_i32_0 : i32, i32
  }
  func.func @transform_2(%arg0: i32, %arg1: i32) -> (i32, i32) {
    %c0_i32 = arith.constant 0 : i32
    %c0_i32_0 = arith.constant 0 : i32
    %c0_i32_1 = arith.constant 0 : i32
    return %c0_i32, %c0_i32_0 : i32, i32
  }
  func.func @transform_3(%arg0: i32, %arg1: i32) -> (i32, i32) {
    %c0_i32 = arith.constant 0 : i32
    %c0_i32_0 = arith.constant 0 : i32
    %c0_i32_1 = arith.constant 0 : i32
    return %c0_i32, %c0_i32_0 : i32, i32
  }
  func.func @transform_4(%arg0: i32, %arg1: i32) -> (i32, i32) {
    %c0_i32 = arith.constant 0 : i32
    %c0_i32_0 = arith.constant 0 : i32
    %c0_i32_1 = arith.constant 0 : i32
    return %c0_i32, %c0_i32_0 : i32, i32
  }
  func.func @transform_5(%arg0: i32, %arg1: i32) -> (i32, i32) {
    %c0_i32 = arith.constant 0 : i32
    %c0_i32_0 = arith.constant 0 : i32
    %c0_i32_1 = arith.constant 0 : i32
    return %c0_i32, %c0_i32_0 : i32, i32
  }
  func.func @transform_6(%arg0: i32, %arg1: i32) -> (i32, i32) {
    %c0_i32 = arith.constant 0 : i32
    %c0_i32_0 = arith.constant 0 : i32
    %c0_i32_1 = arith.constant 0 : i32
    return %c0_i32, %c0_i32_0 : i32, i32
  }
  func.func @transform_7(%arg0: i32, %arg1: i32) -> (i32, i32) {
    %c0_i32 = arith.constant 0 : i32
    %c0_i32_0 = arith.constant 0 : i32
    return %arg0, %c0_i32 : i32, i32
  }
}

</mosaic_0001>

<llo_original>
// kernel: tpu_custom_call.1
$region0: #{tpu_custom_call.1}
  #allocation0 [shape = 'u32[]', space=smem, size = 0x4, offset = 0x4, fixed_abs, tag = 'smem constant byte address 0x4 - core index']
  #allocation1 [shape = 'u32[72,128]{1,0:T(1,128)}', space=vmem, size = 0x9000, scoped, tag = 'internal scratch']
  #allocation2 [shape = 'f32[1,1]{1,0:T(1,128)}', space=vmem, size = 0x200, scoped, tag = 'scratch operand']
  %s0 = inlined_call_operand.hbm [shape: f32[16,16], index: 0, kind: input, shape index: {}]
  %s1 = inlined_call_operand.hbm [shape: f32[16,64], index: 1, kind: input, shape index: {}]
  %s2 = inlined_call_operand.vmem [shape: f32[1,64], index: 2, kind: input, shape index: {}]
  %s3 = inlined_call_operand.vmem [shape: f32[64,64], index: 3, kind: input, shape index: {}]
  %s4 = inlined_call_operand.vmem [shape: f32[1,64], index: 4, kind: input, shape index: {}]
  %s5 = inlined_call_operand.vmem [shape: f32[64,5], index: 5, kind: input, shape index: {}]
  %s6 = inlined_call_operand.vmem [shape: f32[1,5], index: 6, kind: input, shape index: {}]
  %s7 = inlined_call_operand.hbm [shape: f32[16,128], index: 7, kind: output, shape index: {}]
  %s8 = sld [smem:[#allocation0]]
  $region77: #{tpu_custom_call.1} parent=0
    _
  %s10 = ssub.s32 1, %s8
  %s11 = scalar_select 0, %s10, %s8
  $region1: #{tpu_custom_call.1} parent=0
    #allocation3 [shape = 'u8[8192]{0}', space=vmem, size = 0x2000, scoped, tag = 'input window, operand 0']
    #allocation4 [shape = 's32[2]{0}', space=sflag, size = 0x8, scoped, tag = 'scoped memory for tpu_custom_call.1']
    #allocation5 [shape = 's32[2]{0}', space=sflag, size = 0x8, scoped, tag = 'scoped memory for tpu_custom_call.1']
    #allocation6 [shape = 'u8[8192]{0}', space=vmem, size = 0x2000, scoped, tag = 'input window, operand 1, single buffered']
    #allocation7 [shape = 's32[1]{0}', space=sflag, size = 0x4, scoped, tag = 'scoped memory for tpu_custom_call.1']
    #allocation8 [shape = 'u8[8192]{0}', space=vmem, size = 0x2000, scoped, tag = 'output window, operand 0']
    %12 = vsyncpa [#allocation4], 0
    %s13 = scalar_lea.sflag [#allocation4], 1
    %14 = vsyncpa %s13, 0
    %15 = vsyncpa [#allocation7], 0
    %16 = vsyncpa [#allocation5], 0
    %s17 = scalar_lea.sflag [#allocation5], 1
    %18 = vsyncpa %s17, 0
    loop: start=0, step=1, limit=4
    $region2: #{tpu_custom_call.1} parent=1 // loop_pre_header
      _
    $region3: #{tpu_custom_call.1} parent=1 // loop_header
      %s20 = sphi 0, %s24
      %p21 = scmp.ge.s32.totalorder %s20, 4
      %s27 = sphi 0, %s39
      %s28 = sphi 0, %s35
      %s29 = sphi 0, %s27
      %s30 = sphi 0, %s28
      %s31 = sphi 0, %s29
      %s32 = sphi 0, %s30
      %s44 = sphi 0, %s46
      %s47 = sphi 0, %s44
      %s48 = sphi 0, %s47
      %s64 = sphi 0, %s48
      %s68 = sphi 0, %s68
      %s70 = sphi 0, %s68
      %s71 = sphi 0, %s70
      %s85 = sphi 0, %s71
      %s89 = sphi 0, %s89
      %s91 = sphi 0, %s89
      %s92 = sphi 0, %s91
      %s106 = sphi 0, %s92
      %s110 = sphi 0, %s110
      %s112 = sphi 0, %s110
      %s113 = sphi 0, %s112
      %s127 = sphi 0, %s113
      %s131 = sphi 0, %s131
      %s133 = sphi 0, %s131
      %s134 = sphi 0, %s133
      %s148 = sphi 0, %s134
      %s152 = sphi 0, %s152
      %s154 = sphi 0, %s152
      %s155 = sphi 0, %s154
      %s169 = sphi 0, %s155
      %s173 = sphi 0, %s173
      %s175 = sphi 0, %s173
      %s176 = sphi 0, %s175
      %s190 = sphi 0, %s176
      %s196 = sphi 0, %s198
      %s199 = sphi 0, %s196
      %s200 = sphi 0, %s199
      %s216 = sphi 0, %s200
    $region4: #{tpu_custom_call.1} parent=1 // loop_header_branch
      %23 = sbr.rel (%p21) target = $region8
    $region5: #{tpu_custom_call.1} parent=1 // loop_body
      %s25 = ssub.s32 %s20, 1
      %s26 = ssub.s32 %s20, 2
      %s33 = sadd.s32 1, %s28
      %p34 = scmp.ge.s32.totalorder %s33, 1
      %s35 = scalar_select %p34, 0, %s33
      %s36 = sadd.s32 1, %s27
      %s37 = scalar_select %p34, %s36, %s27
      %p38 = scmp.ge.s32.totalorder %s37, 2
      %s39 = scalar_select %p38, 0, %s37
      %s40 = sadd.s32 %s27, %s28
      %s41 = sadd.s32 %s39, %s35
      %s42 = ssub.s32 %s40, %s41
      %p43 = scmp.eq.s32.totalorder %s42, 0
      %s45 = sadd.s32 %s44, 1
      %s46 = scalar_select %p43, %s44, %s45
      %p49 = pneg %p43
      %p50 = scmp.eq.s32.totalorder %s20, 1
      %p51 = por %p49, %p50
      %p52 = scmp.ne.s32.totalorder %s44, %s47
      %p53 = scmp.eq.s32.totalorder %s20, 0
      %p54 = por %p52, %p53
      %p55 = scmp.ne.s32.totalorder %s44, %s47
      %p56 = scmp.eq.s32.totalorder %s25, 1
      %p57 = por %p55, %p56
      %p58 = scmp.ne.s32.totalorder %s47, %s48
      %p59 = scmp.eq.s32.totalorder %s25, 0
      %p60 = por %p58, %p59
      %p61 = scmp.ne.s32.totalorder %s47, %s48
      %p62 = scmp.eq.s32.totalorder %s26, 1
      %p63 = por %p61, %p62
      %p65 = scmp.ne.s32.totalorder %s48, %s64
      %p66 = scmp.eq.s32.totalorder %s26, 0
      %p67 = por %p65, %p66
      %s69 = sadd.s32 %s68, 1
      %p72 = scmp.eq.s32.totalorder %s20, 1
      %p73 = scmp.ne.s32.totalorder %s68, %s70
      %p74 = scmp.eq.s32.totalorder %s20, 0
      %p75 = por %p73, %p74
      %p76 = scmp.ne.s32.totalorder %s68, %s70
      %p77 = scmp.eq.s32.totalorder %s25, 1
      %p78 = por %p76, %p77
      %p79 = scmp.ne.s32.totalorder %s70, %s71
      %p80 = scmp.eq.s32.totalorder %s25, 0
      %p81 = por %p79, %p80
      %p82 = scmp.ne.s32.totalorder %s70, %s71
      %p83 = scmp.eq.s32.totalorder %s26, 1
      %p84 = por %p82, %p83
      %p86 = scmp.ne.s32.totalorder %s71, %s85
      %p87 = scmp.eq.s32.totalorder %s26, 0
      %p88 = por %p86, %p87
      %s90 = sadd.s32 %s89, 1
      %p93 = scmp.eq.s32.totalorder %s20, 1
      %p94 = scmp.ne.s32.totalorder %s89, %s91
      %p95 = scmp.eq.s32.totalorder %s20, 0
      %p96 = por %p94, %p95
      %p97 = scmp.ne.s32.totalorder %s89, %s91
      %p98 = scmp.eq.s32.totalorder %s25, 1
      %p99 = por %p97, %p98
      %p100 = scmp.ne.s32.totalorder %s91, %s92
      %p101 = scmp.eq.s32.totalorder %s25, 0
      %p102 = por %p100, %p101
      %p103 = scmp.ne.s32.totalorder %s91, %s92
      %p104 = scmp.eq.s32.totalorder %s26, 1
      %p105 = por %p103, %p104
      %p107 = scmp.ne.s32.totalorder %s92, %s106
      %p108 = scmp.eq.s32.totalorder %s26, 0
      %p109 = por %p107, %p108
      %s111 = sadd.s32 %s110, 1
      %p114 = scmp.eq.s32.totalorder %s20, 1
      %p115 = scmp.ne.s32.totalorder %s110, %s112
      %p116 = scmp.eq.s32.totalorder %s20, 0
      %p117 = por %p115, %p116
      %p118 = scmp.ne.s32.totalorder %s110, %s112
      %p119 = scmp.eq.s32.totalorder %s25, 1
      %p120 = por %p118, %p119
      %p121 = scmp.ne.s32.totalorder %s112, %s113
      %p122 = scmp.eq.s32.totalorder %s25, 0
      %p123 = por %p121, %p122
      %p124 = scmp.ne.s32.totalorder %s112, %s113
      %p125 = scmp.eq.s32.totalorder %s26, 1
      %p126 = por %p124, %p125
      %p128 = scmp.ne.s32.totalorder %s113, %s127
      %p129 = scmp.eq.s32.totalorder %s26, 0
      %p130 = por %p128, %p129
      %s132 = sadd.s32 %s131, 1
      %p135 = scmp.eq.s32.totalorder %s20, 1
      %p136 = scmp.ne.s32.totalorder %s131, %s133
      %p137 = scmp.eq.s32.totalorder %s20, 0
      %p138 = por %p136, %p137
      %p139 = scmp.ne.s32.totalorder %s131, %s133
      %p140 = scmp.eq.s32.totalorder %s25, 1
      %p141 = por %p139, %p140
      %p142 = scmp.ne.s32.totalorder %s133, %s134
      %p143 = scmp.eq.s32.totalorder %s25, 0
      %p144 = por %p142, %p143
      %p145 = scmp.ne.s32.totalorder %s133, %s134
      %p146 = scmp.eq.s32.totalorder %s26, 1
      %p147 = por %p145, %p146
      %p149 = scmp.ne.s32.totalorder %s134, %s148
      %p150 = scmp.eq.s32.totalorder %s26, 0
      %p151 = por %p149, %p150
      %s153 = sadd.s32 %s152, 1
      %p156 = scmp.eq.s32.totalorder %s20, 1
      %p157 = scmp.ne.s32.totalorder %s152, %s154
      %p158 = scmp.eq.s32.totalorder %s20, 0
      %p159 = por %p157, %p158
      %p160 = scmp.ne.s32.totalorder %s152, %s154
      %p161 = scmp.eq.s32.totalorder %s25, 1
      %p162 = por %p160, %p161
      %p163 = scmp.ne.s32.totalorder %s154, %s155
      %p164 = scmp.eq.s32.totalorder %s25, 0
      %p165 = por %p163, %p164
      %p166 = scmp.ne.s32.totalorder %s154, %s155
      %p167 = scmp.eq.s32.totalorder %s26, 1
      %p168 = por %p166, %p167
      %p170 = scmp.ne.s32.totalorder %s155, %s169
      %p171 = scmp.eq.s32.totalorder %s26, 0
      %p172 = por %p170, %p171
      %s174 = sadd.s32 %s173, 1
      %p177 = scmp.eq.s32.totalorder %s20, 1
      %p178 = scmp.ne.s32.totalorder %s173, %s175
      %p179 = scmp.eq.s32.totalorder %s20, 0
      %p180 = por %p178, %p179
      %p181 = scmp.ne.s32.totalorder %s173, %s175
      %p182 = scmp.eq.s32.totalorder %s25, 1
      %p183 = por %p181, %p182
      %p184 = scmp.ne.s32.totalorder %s175, %s176
      %p185 = scmp.eq.s32.totalorder %s25, 0
      %p186 = por %p184, %p185
      %p187 = scmp.ne.s32.totalorder %s175, %s176
      %p188 = scmp.eq.s32.totalorder %s26, 1
      %p189 = por %p187, %p188
      %p191 = scmp.ne.s32.totalorder %s176, %s190
      %p192 = scmp.eq.s32.totalorder %s26, 0
      %p193 = por %p191, %p192
      %s194 = ssub.s32 %s27, %s39
      %p195 = scmp.eq.s32.totalorder %s194, 0
      %s197 = sadd.s32 %s196, 1
      %s198 = scalar_select %p195, %s196, %s197
      %p201 = pneg %p195
      %p202 = scmp.eq.s32.totalorder %s20, 1
      %p203 = por %p201, %p202
      %p204 = scmp.ne.s32.totalorder %s196, %s199
      %p205 = scmp.eq.s32.totalorder %s20, 0
      %p206 = por %p204, %p205
      %p207 = scmp.ne.s32.totalorder %s196, %s199
      %p208 = scmp.eq.s32.totalorder %s25, 1
      %p209 = por %p207, %p208
      %p210 = scmp.ne.s32.totalorder %s199, %s200
      %p211 = scmp.eq.s32.totalorder %s25, 0
      %p212 = por %p210, %p211
      %p213 = scmp.ne.s32.totalorder %s199, %s200
      %p214 = scmp.eq.s32.totalorder %s26, 1
      %p215 = por %p213, %p214
      %p217 = scmp.ne.s32.totalorder %s200, %s216
      %p218 = scmp.eq.s32.totalorder %s26, 0
      %p219 = por %p217, %p218
      %p220 = scmp.le.s32.totalorder 1, %s20
      %p221 = scmp.lt.s32.totalorder %s20, 3
      %p222 = pnand %p220, %p221
      %p223 = pneg %p222
      // Predicated region
      $region9: #{tpu_custom_call.1} parent=5 // pred_check
        _
      $region10: #{tpu_custom_call.1} parent=5 // pred_check_branch
        %225 = sbr.rel (%p222) target = $region12
      $region11: #{tpu_custom_call.1} parent=5 // pred_region
        %s226 = ssub.s32 %s20, 1
        // Predicated region
        $region13: #{tpu_custom_call.1} parent=11 // pred_check
          %p227 = pneg %p81
        $region14: #{tpu_custom_call.1} parent=11 // pred_check_branch
          %229 = sbr.rel (%p227) target = $region16
        $region15: #{tpu_custom_call.1} parent=11 // pred_region
          %231 = vsyncadd [#allocation7], 0
          %s232 = sshll.u32 %s1, 4
          %s233 = int_to_ptr.hbm [resolvable:$true] %s232
          %s234 = sshll.u32 [#allocation6], 4
          %s235 = int_to_ptr.vmem [resolvable:$true] %s234
          %240 = dma.hbm_to_vmem [thread:$0]  %s233, 256, %s235, [#allocation7], 128, 128, 8
        $region16: #{tpu_custom_call.1} parent=11 // pred_fallthru
          _
        // Predicated region
        $region17: #{tpu_custom_call.1} parent=11 // pred_check
          %p241 = pneg %p102
        $region18: #{tpu_custom_call.1} parent=11 // pred_check_branch
          %243 = sbr.rel (%p241) target = $region20
        $region19: #{tpu_custom_call.1} parent=11 // pred_region
          _
        $region20: #{tpu_custom_call.1} parent=11 // pred_fallthru
          _
        // Predicated region
        $region21: #{tpu_custom_call.1} parent=11 // pred_check
          %p244 = pneg %p123
        $region22: #{tpu_custom_call.1} parent=11 // pred_check_branch
          %246 = sbr.rel (%p244) target = $region24
        $region23: #{tpu_custom_call.1} parent=11 // pred_region
          _
        $region24: #{tpu_custom_call.1} parent=11 // pred_fallthru
          _
        // Predicated region
        $region25: #{tpu_custom_call.1} parent=11 // pred_check
          %p247 = pneg %p144
        $region26: #{tpu_custom_call.1} parent=11 // pred_check_branch
          %249 = sbr.rel (%p247) target = $region28
        $region27: #{tpu_custom_call.1} parent=11 // pred_region
          _
        $region28: #{tpu_custom_call.1} parent=11 // pred_fallthru
          _
        // Predicated region
        $region29: #{tpu_custom_call.1} parent=11 // pred_check
          %p250 = pneg %p165
        $region30: #{tpu_custom_call.1} parent=11 // pred_check_branch
          %252 = sbr.rel (%p250) target = $region32
        $region31: #{tpu_custom_call.1} parent=11 // pred_region
          _
        $region32: #{tpu_custom_call.1} parent=11 // pred_fallthru
          _
        // Predicated region
        $region33: #{tpu_custom_call.1} parent=11 // pred_check
          %p253 = pneg %p186
        $region34: #{tpu_custom_call.1} parent=11 // pred_check_branch
          %255 = sbr.rel (%p253) target = $region36
        $region35: #{tpu_custom_call.1} parent=11 // pred_region
          _
        $region36: #{tpu_custom_call.1} parent=11 // pred_fallthru
          _
      $region12: #{tpu_custom_call.1} parent=5 // pred_fallthru
        _
      %p256 = scmp.lt.s32.totalorder %s20, 2
      // Predicated region
      $region37: #{tpu_custom_call.1} parent=5 // pred_check
        %p257 = pneg %p256
      $region38: #{tpu_custom_call.1} parent=5 // pred_check_branch
        %259 = sbr.rel (%p257) target = $region40
      $region39: #{tpu_custom_call.1} parent=5 // pred_region
        // Predicated region
        $region41: #{tpu_custom_call.1} parent=39 // pred_check
          %p260 = pneg %p54
        $region42: #{tpu_custom_call.1} parent=39 // pred_check_branch
          %262 = sbr.rel (%p260) target = $region44
        $region43: #{tpu_custom_call.1} parent=39 // pred_region
          %s263 = sand.u32 %s44, 1
          %s264 = scalar_lea.sflag [#allocation4], %s263
          %s265 = sand.u32 %s44, 1
          %s266 = smul.addr %s265, 8
          %s267 = scalar_lea.vmem [#allocation3], %s266
          %s268 = sadd.s32 %s27, %s28
          %270 = vsyncadd %s264, 0
          %s271 = smul.addr %s268, 8
          %s272 = scalar_lea.hbm %s0, %s271
          %s274 = sshll.u32 %s272, 4
          %s275 = int_to_ptr.hbm [resolvable:$true] %s274
          %s276 = sshll.u32 %s267, 4
          %s277 = int_to_ptr.vmem [resolvable:$true] %s276
          %279 = dma.hbm_to_vmem [thread:$0]  %s275, 128, %s277, %s264
        $region44: #{tpu_custom_call.1} parent=39 // pred_fallthru
          _
      $region40: #{tpu_custom_call.1} parent=5 // pred_fallthru
        _
      %p280 = scmp.le.s32.totalorder 1, %s20
      %p281 = scmp.lt.s32.totalorder %s20, 3
      %p282 = pnand %p280, %p281
      %p283 = pneg %p282
      // Predicated region
      $region45: #{tpu_custom_call.1} parent=5 // pred_check
        _
      $region46: #{tpu_custom_call.1} parent=5 // pred_check_branch
        %285 = sbr.rel (%p282) target = $region48
      $region47: #{tpu_custom_call.1} parent=5 // pred_region
        %s286 = ssub.s32 %s20, 1
        %s287 = sand.u32 %s47, 1
        %s288 = scalar_lea.sflag [#allocation4], %s287
        %s289 = sand.u32 %s47, 1
        %s290 = smul.addr %s289, 8
        %s291 = scalar_lea.vmem [#allocation3], %s290
        // Predicated region
        $region49: #{tpu_custom_call.1} parent=47 // pred_check
          %p292 = pneg %p60
        $region50: #{tpu_custom_call.1} parent=47 // pred_check_branch
          %294 = sbr.rel (%p292) target = $region52
        $region51: #{tpu_custom_call.1} parent=47 // pred_region
          %296 = dma.done %s288, 128
        $region52: #{tpu_custom_call.1} parent=47 // pred_fallthru
          _
        // Predicated region
        $region53: #{tpu_custom_call.1} parent=47 // pred_check
          %p297 = pneg %p81
        $region54: #{tpu_custom_call.1} parent=47 // pred_check_branch
          %299 = sbr.rel (%p297) target = $region56
        $region55: #{tpu_custom_call.1} parent=47 // pred_region
          %301 = dma.done [#allocation7], 256
        $region56: #{tpu_custom_call.1} parent=47 // pred_fallthru
          _
        %s302 = sand.u32 %s47, 1
        %s303 = scalar_lea.sflag [#allocation4], %s302
        %s304 = sand.u32 %s47, 1
        %s305 = smul.addr %s304, 8
        %s306 = scalar_lea.vmem [#allocation3], %s305
        %p307 = pneg %p60
        %p308 = pneg %p57
        %p309 = pneg %p81
        %p310 = pneg %p78
        %p311 = pneg %p102
        %p312 = pneg %p99
        %p313 = pneg %p123
        %p314 = pneg %p120
        %p315 = pneg %p144
        %p316 = pneg %p141
        %p317 = pneg %p165
        %p318 = pneg %p162
        %p319 = pneg %p186
        %p320 = pneg %p183
        %p321 = pneg %p212
        %p322 = pneg %p209
        %s323 = sand.u32 %s199, 1
        %s324 = scalar_lea.sflag [#allocation5], %s323
        %s325 = sand.u32 %s199, 1
        %s326 = smul.addr %s325, 8
        %s327 = scalar_lea.vmem [#allocation8], %s326
        %s328 = sadd.s32 %s29, %s30
        %p329 = scmp.eq.s32.totalorder %s30, 0
        // Predicated region
        $region57: #{tpu_custom_call.1} parent=47 // pred_check
          %p330 = pneg %p329
        $region58: #{tpu_custom_call.1} parent=47 // pred_check_branch
          %332 = sbr.rel (%p330) target = $region60
        $region59: #{tpu_custom_call.1} parent=47 // pred_region
          %vm333 = vcmask 0
          %334 = vst.msk [vmem:[#allocation2] sm:$0x1] %vm333, 0.0
        $region60: #{tpu_custom_call.1} parent=47 // pred_fallthru
          _
        %v335 = vld [vmem:[%s291] sm:$0xff]
        %v336 = vld [vmem:[#allocation6] sm:$0xff]
        %v337 = vld [vmem:[#allocation6 + $0x8] sm:$0xff]
        %v338 = vld [vmem:[%s2] sm:$0x1]
        %v340 = vperm.slane %v338, 0
        %vm342 = vcmask 130048
        %v344 = vsel %vm342, %v335, 0
        %346 = vmatpush.msra.mxu0 0.0
        %347 = vmatpush.msra.mxu0 0.0
        %348 = vmatpush.msra.mxu0 0.0
        %349 = vmatpush.msra.mxu0 0.0
        %350 = vmatpush.msra.mxu0 0.0
        %351 = vmatpush.msra.mxu0 0.0
        %352 = vmatpush.msra.mxu0 0.0
        %353 = vmatpush.msra.mxu0 0.0
        %354 = vmatpush.msra.mxu0 0.0
        %355 = vmatpush.msra.mxu0 0.0
        %356 = vmatpush.msra.mxu0 0.0
        %357 = vmatpush.msra.mxu0 0.0
        %358 = vmatpush.msra.mxu0 0.0
        %359 = vmatpush.msra.mxu0 0.0
        %360 = vmatpush.msra.mxu0 %v337
        %361 = vmatpush.msra.mxu0 %v336
        %362 = vmatmul.f32.gmra.mxu0 %v344
        %v363 = vpop.f32.mrf.mxu0
        %v364 = vadd.f32 %v340, %v363
        %365 = vdwg.mxu0
        %v366 = vtanh.pop %v364
        %v367 = vld [vmem:[%s3] sm:$0xff]
        %v368 = vld [vmem:[%s3 + $0x8] sm:$0xff]
        %v369 = vld [vmem:[%s3 + $0x10] sm:$0xff]
        %v370 = vld [vmem:[%s3 + $0x18] sm:$0xff]
        %v371 = vld [vmem:[%s3 + $0x20] sm:$0xff]
        %v372 = vld [vmem:[%s3 + $0x28] sm:$0xff]
        %v373 = vld [vmem:[%s3 + $0x30] sm:$0xff]
        %v374 = vld [vmem:[%s3 + $0x38] sm:$0xff]
        %v375 = vld [vmem:[%s4] sm:$0x1]
        %v377 = vperm.slane %v375, 0
        %vm379 = vcmask 523264
        %v381 = vsel %vm379, %v366, 0
        %383 = vmatpush.msra.mxu0 0.0
        %384 = vmatpush.msra.mxu0 0.0
        %385 = vmatpush.msra.mxu0 0.0
        %386 = vmatpush.msra.mxu0 0.0
        %387 = vmatpush.msra.mxu0 0.0
        %388 = vmatpush.msra.mxu0 0.0
        %389 = vmatpush.msra.mxu0 0.0
        %390 = vmatpush.msra.mxu0 0.0
        %391 = vmatpush.msra.mxu0 %v374
        %392 = vmatpush.msra.mxu0 %v373
        %393 = vmatpush.msra.mxu0 %v372
        %394 = vmatpush.msra.mxu0 %v371
        %395 = vmatpush.msra.mxu0 %v370
        %396 = vmatpush.msra.mxu0 %v369
        %397 = vmatpush.msra.mxu0 %v368
        %398 = vmatpush.msra.mxu0 %v367
        %399 = vmatmul.f32.gmra.mxu0 %v381
        %v400 = vpop.f32.mrf.mxu0
        %v401 = vadd.f32 %v377, %v400
        %402 = vdwg.mxu0
        %v403 = vtanh.pop %v401
        %v404 = vld [vmem:[%s5] sm:$0xff]
        %v405 = vld [vmem:[%s5 + $0x8] sm:$0xff]
        %v406 = vld [vmem:[%s5 + $0x10] sm:$0xff]
        %v407 = vld [vmem:[%s5 + $0x18] sm:$0xff]
        %v408 = vld [vmem:[%s5 + $0x20] sm:$0xff]
        %v409 = vld [vmem:[%s5 + $0x28] sm:$0xff]
        %v410 = vld [vmem:[%s5 + $0x30] sm:$0xff]
        %v411 = vld [vmem:[%s5 + $0x38] sm:$0xff]
        %v412 = vld [vmem:[%s6] sm:$0x1]
        %v414 = vperm.slane %v412, 0
        %v417 = vsel %vm379, %v403, 0
        %419 = vmatpush.msra.mxu0 0.0
        %420 = vmatpush.msra.mxu0 0.0
        %421 = vmatpush.msra.mxu0 0.0
        %422 = vmatpush.msra.mxu0 0.0
        %423 = vmatpush.msra.mxu0 0.0
        %424 = vmatpush.msra.mxu0 0.0
        %425 = vmatpush.msra.mxu0 0.0
        %426 = vmatpush.msra.mxu0 0.0
        %427 = vmatpush.msra.mxu0 %v411
        %428 = vmatpush.msra.mxu0 %v410
        %429 = vmatpush.msra.mxu0 %v409
        %430 = vmatpush.msra.mxu0 %v408
        %431 = vmatpush.msra.mxu0 %v407
        %432 = vmatpush.msra.mxu0 %v406
        %433 = vmatpush.msra.mxu0 %v405
        %434 = vmatpush.msra.mxu0 %v404
        %435 = vmatmul.f32.gmra.mxu0 %v417
        %v436 = vpop.f32.mrf.mxu0
        %v437 = vadd.f32 %v414, %v436
        %438 = vdwg.mxu0
        %v439 = vmul.f32 %v437, %v437
        %v440 = vlaneseq
        %v441 = vshrl.u32 %v440, 7
        %s442 = sadd.s32 %s29, %s30
        %s443 = smul.u32 %s442, 8
        %v444 = vstv %s443
        %v445 = vadd.s32 %v441, %v444
        %vm446 = vcmp.lt.s32.totalorder %v445, 8
        %v447 = vsel %vm446, 1, 0
        %vm448 = vcmp.eq.s32.totalorder %v447, 1
        %v449 = vsel %vm448, %v439, 0.0
        %vm450 = vcmask 39936
        %v451 = vsel %vm450, %v449, 0.0
        %452 = vadd.xlane.f32.xlu0 %v451
        %v453 = vpop.xlane.xlu0 %452
        %v454 = vrot.slane %v453, 4
        %v455 = vadd.f32 %v453, %v454
        %v456 = vrot.slane %v455, 2
        %v457 = vadd.f32 %v455, %v456
        %v458 = vrot.slane %v457, 1
        %v459 = vadd.f32 %v457, %v458
        %v460 = vld [vmem:[#allocation2] sm:$0x1]
        %v461 = vadd.f32 %v460, %v459
        %vm462 = vcmask 0
        %463 = vst.msk [vmem:[#allocation2] sm:$0x1] %vm462, %v461
        // Predicated region
        $region61: #{tpu_custom_call.1} parent=47 // pred_check
          %p464 = pneg %p329
        $region62: #{tpu_custom_call.1} parent=47 // pred_check_branch
          %466 = sbr.rel (%p464) target = $region64
        $region63: #{tpu_custom_call.1} parent=47 // pred_region
          %v467 = vld [vmem:[#allocation2] sm:$0x1]
          %v469 = vperm.slane %v467, 0
          %470 = vset.pattern.permute.xlu0 0
          %471 = vperm.xlu0 %470, %v469
          %v472 = vpop.permute.xlu0 %471
          %v474 = vadd.f32 %v472, 0.0
          %475 = vst [vmem:[%s327] sm:$0xff] %v474
        $region64: #{tpu_custom_call.1} parent=47 // pred_fallthru
          _
        %s476 = sand.u32 %s199, 1
        %s477 = scalar_lea.sflag [#allocation5], %s476
        %s478 = sand.u32 %s199, 1
        %s479 = smul.addr %s478, 8
        %s480 = scalar_lea.vmem [#allocation8], %s479
        // Predicated region
        $region65: #{tpu_custom_call.1} parent=47 // pred_check
          %p481 = pneg %p209
        $region66: #{tpu_custom_call.1} parent=47 // pred_check_branch
          %483 = sbr.rel (%p481) target = $region68
        $region67: #{tpu_custom_call.1} parent=47 // pred_region
          %485 = vsyncadd %s477, 0
          %s486 = smul.addr %s29, 8
          %s487 = scalar_lea.hbm %s7, %s486
          %s489 = sshll.u32 %s480, 4
          %s490 = int_to_ptr.vmem [resolvable:$true] %s489
          %s491 = sshll.u32 %s487, 4
          %s492 = int_to_ptr.hbm [resolvable:$true] %s491
          %494 = dma.vmem_to_hbm [thread:$0]  %s490, 128, %s492, %s477
        $region68: #{tpu_custom_call.1} parent=47 // pred_fallthru
          _
      $region48: #{tpu_custom_call.1} parent=5 // pred_fallthru
        _
      %p495 = scmp.le.s32.totalorder 2, %s20
      // Predicated region
      $region69: #{tpu_custom_call.1} parent=5 // pred_check
        %p496 = pneg %p495
      $region70: #{tpu_custom_call.1} parent=5 // pred_check_branch
        %498 = sbr.rel (%p496) target = $region72
      $region71: #{tpu_custom_call.1} parent=5 // pred_region
        %s499 = ssub.s32 %s20, 2
        // Predicated region
        $region73: #{tpu_custom_call.1} parent=71 // pred_check
          %p500 = pneg %p215
        $region74: #{tpu_custom_call.1} parent=71 // pred_check_branch
          %502 = sbr.rel (%p500) target = $region76
        $region75: #{tpu_custom_call.1} parent=71 // pred_region
          %s503 = sand.u32 %s200, 1
          %s504 = scalar_lea.sflag [#allocation5], %s503
          %s505 = sand.u32 %s200, 1
          %s506 = smul.addr %s505, 8
          %s507 = scalar_lea.vmem [#allocation8], %s506
          %509 = dma.done %s504, 128
        $region76: #{tpu_custom_call.1} parent=71 // pred_fallthru
          _
      $region72: #{tpu_custom_call.1} parent=5 // pred_fallthru
        _
    $region6: #{tpu_custom_call.1} parent=1 // loop_footer
      %s24 = sadd.s32 1, %s20
    $region7: #{tpu_custom_call.1} parent=1 // loop_footer_branch
      %19 = sbr.rel target = $region3
    $region8: #{tpu_custom_call.1} parent=1 // loop_exit
      _
    %510 = vsyncpa [#allocation4], 1
    %s511 = scalar_lea.sflag [#allocation4], 1
    %512 = vsyncpa %s511, 1
    %513 = vsyncpa [#allocation7], 1
    %514 = vsyncpa [#allocation5], 1
    %s515 = scalar_lea.sflag [#allocation5], 1
    %516 = vsyncpa %s515, 1

</llo_original>
